<compile_context>
chip_gen: v5e
topology: v5e:2x2
jax: 0.10.0
libtpu: 0.0.40
codegen_flags: <defaults>
</compile_context>

<pallas_src>
import functools

import jax
import jax.numpy as jnp
from jax.experimental import pallas as pl
from jax.experimental.pallas import tpu as pltpu


def make_d2d_kernel(num_hidden, num_pairs, num_freq, min_power, max_power):
    """Fused MLP (Linear + folded-BN + ReLU blocks) + fused power/freq heads.

    Refs per hidden layer: W (in, h) bf16, bss (3, h) f32 = [bias; bn_scale; bn_shift].
    Head refs: Wh (h, F+P) bf16 with columns [freq | power], bh (1, F+P) f32,
    G (F+P, F+P) f32 block-diagonal ones over the freq groups (segmented-sum matmul).
    Output: one lane-packed slab (TB, F+P) = [fa_flat | power].
    """
    power_range = max_power - min_power
    F = num_pairs * num_freq  # freq lanes [0, F); power lanes [F, F+num_pairs)

    def kernel(*refs):
        idx = 0
        h = refs[idx][...]  # f32 activations
        idx += 1

        for _ in range(num_hidden):
            W = refs[idx][...]        # bf16 (in, h)
            bss = refs[idx + 1][...]  # f32  (3, h)
            idx += 2
            b = bss[0:1, :]
            scale = bss[1:2, :]
            shift = bss[2:3, :]
            # h = relu(Linear(h))  -- bf16 operands, f32 accumulation on the MXU.
            z = jnp.dot(h.astype(jnp.bfloat16), W,
                        preferred_element_type=jnp.float32) + b
            z = jnp.maximum(z, 0.0)
            # h = relu(BatchNorm1d(h)) with eval-mode BN folded into a single f32 FMA.
            h = jnp.maximum(z * scale + shift, 0.0)
            # explicit nn.ReLU module -> relu(relu(h)) is idempotent, already applied.

        Wh = refs[idx][...]       # bf16 (h, F+P), columns [freq | power]
        bh = refs[idx + 1][...]   # f32  (1, F+P)
        G = refs[idx + 2][...]    # f32  (F+P, F+P) block-diag ones over freq groups
        out_ref = refs[idx + 3]

        # Single fused head matmul.
        head = jnp.dot(h.astype(jnp.bfloat16), Wh,
                       preferred_element_type=jnp.float32) + bh

        lane = jax.lax.broadcasted_iota(jnp.int32, head.shape, 1)
        is_freq = lane < F

        # Segmented softmax, fully in the flat lane layout (no reshape / concat).
        # Max over all freq lanes of the row (instead of per group) is mathematically
        # identical after normalization and numerically safe for network-sized logits.
        head_f = jnp.where(is_freq, head, -jnp.inf)
        m = jnp.max(head_f, axis=-1, keepdims=True)
        e = jnp.exp(head_f - m)                      # 0 in power lanes
        # Per-group sums broadcast back to every lane of the group via a tiny matmul.
        s = jnp.dot(e, G, preferred_element_type=jnp.float32)
        s = jnp.where(is_freq, s, 1.0)               # avoid 0-division in power lanes
        fa = e * pl.reciprocal(s, approx=False)      # exact reciprocal on the EUP slot

        # Power head: sigmoid scaled to [min_power, max_power] (computed on all lanes,
        # selected only in the power lanes below).
        pw = jax.nn.sigmoid(head) * power_range + min_power

        # One unmasked lane-dense store of [fa_flat | power].
        out_ref[...] = jnp.where(is_freq, fa, pw).astype(out_ref.dtype)

    return kernel


def init_params(key, num_pairs, num_freq, hidden_sizes, dtype=jnp.float32):
    """Deterministic init mimicking PyTorch defaults (Linear: U(-k, k), k=1/sqrt(fan_in);
    BatchNorm1d: gamma=1, beta=0, running_mean=0, running_var=1). Returns the RAW
    (unfolded) parameter list: [W, b, gamma, beta, mean, var] * L + [Wp, bp, Wf, bf]."""
    params = []
    in_dim = num_pairs * num_pairs
    for h in hidden_sizes:
        key, kw, kb = jax.random.split(key, 3)
        k = 1.0 / jnp.sqrt(jnp.asarray(in_dim, dtype))
        W = jax.random.uniform(kw, (in_dim, h), dtype, -k, k)
        b = jax.random.uniform(kb, (1, h), dtype, -k, k)
        gamma = jnp.ones((1, h), dtype)
        beta = jnp.zeros((1, h), dtype)
        mean = jnp.zeros((1, h), dtype)
        var = jnp.ones((1, h), dtype)
        params.extend([W, b, gamma, beta, mean, var])
        in_dim = h
    key, kw, kb = jax.random.split(key, 3)
    k = 1.0 / jnp.sqrt(jnp.asarray(in_dim, dtype))
    Wp = jax.random.uniform(kw, (in_dim, num_pairs), dtype, -k, k)
    bp = jax.random.uniform(kb, (1, num_pairs), dtype, -k, k)
    key, kw, kb = jax.random.split(key, 3)
    Wf = jax.random.uniform(kw, (in_dim, num_pairs * num_freq), dtype, -k, k)
    bf = jax.random.uniform(kb, (1, num_pairs * num_freq), dtype, -k, k)
    params.extend([Wp, bp, Wf, bf])
    return params


def fold_params(raw_params, num_pairs, num_freq, num_hidden, eps=1e-5):
    """Host-side packing.

    Per hidden layer: fold eval-mode BN into (scale, shift), pack (b, scale, shift)
    into one (3, h) f32 array, store W in bf16.  Heads: concatenate as [Wf | Wp]
    (freq block starts at lane 0) in bf16 plus an f32 bias row, and build the
    block-diagonal ones matrix G used for the in-kernel segmented softmax sum.
    Layout: [W, bss] * L + [Wh, bh, G].
    """
    packed = []
    idx = 0
    for _ in range(num_hidden):
        W, b, gamma, beta, mean, var = raw_params[idx:idx + 6]
        idx += 6
        scale = gamma * jax.lax.rsqrt(var + eps)
        shift = beta - mean * scale
        bss = jnp.concatenate([b, scale, shift], axis=0).astype(jnp.float32)
        packed.extend([W.astype(jnp.bfloat16), bss])
    Wp, bp, Wf, bf = raw_params[idx:idx + 4]
    Wh = jnp.concatenate([Wf, Wp], axis=1).astype(jnp.bfloat16)   # [freq | power]
    bh = jnp.concatenate([bf, bp], axis=1).astype(jnp.float32)

    F = num_pairs * num_freq
    out_w = F + num_pairs
    i = jnp.arange(out_w)
    same_group = (i[:, None] // num_freq) == (i[None, :] // num_freq)
    in_freq = i < F
    G = (same_group & in_freq[:, None] & in_freq[None, :]).astype(jnp.float32)

    packed.extend([Wh, bh, G])
    return packed


def _pick_batch_tile(batch):
    """Largest power-of-two tile (multiple of 8 f32 sublanes, <= 2048) dividing batch,
    reduced if needed so the grid has >= 2 steps (lets v7x shard the batch axis across
    its two TensorCores; the extra ~0.35 us grid step is negligible on v5e/v6e)."""
    tb = None
    for cand in (2048, 1024, 512, 256, 128, 64, 32, 16, 8):
        if batch % cand == 0:
            tb = cand
            break
    if tb is None:
        return batch  # batch not a multiple of 8: single full-batch block (still legal).
    while tb > 8 and batch // tb < 2:
        tb //= 2
    return tb


@functools.partial(jax.jit, static_argnames=(
    "num_pairs", "num_freq", "num_hidden", "min_power", "max_power"))
def d2d_forward(x, packed_params, *, num_pairs, num_freq, num_hidden,
                min_power=1e-10, max_power=1.0):
    batch, in_dim = x.shape
    F = num_pairs * num_freq
    out_width = F + num_pairs

    tb = _pick_batch_tile(batch)
    if batch % tb != 0:
        tb = batch
    grid = (batch // tb,)

    kernel = make_d2d_kernel(num_hidden, num_pairs, num_freq, min_power, max_power)

    # Weights / folded-BN / head / G stay VMEM-resident across the batch grid
    # (constant index_map -> no re-DMA on subsequent grid steps).
    param_specs = [pl.BlockSpec(p.shape, lambda i: (0, 0)) for p in packed_params]

    out = pl.pallas_call(
        kernel,
        out_shape=jax.ShapeDtypeStruct((batch, out_width), jnp.float32),
        grid=grid,
        in_specs=[pl.BlockSpec((tb, in_dim), lambda i: (i, 0))] + param_specs,
        out_specs=pl.BlockSpec((tb, out_width), lambda i: (i, 0)),
        compiler_params=pltpu.CompilerParams(
            dimension_semantics=("parallel",),   # megacore sharding on v7x
        ),
    )(x, *packed_params)

    # Free metadata ops in the wrapper: slab layout is [fa_flat | power].
    fa_probs = out[:, :F].reshape(batch, num_pairs, num_freq)
    power_values = out[:, F:]
    return power_values, fa_probs


def d2d_reference(x, raw_params, num_pairs, num_freq, num_hidden,
                  min_power=1e-10, max_power=1.0, eps=1e-5):
    """Pure-JAX f32 reference of the same forward pass using the RAW (unfolded) params."""
    h = x
    idx = 0
    for _ in range(num_hidden):
        W, b, gamma, beta, mean, var = raw_params[idx:idx + 6]
        idx += 6
        h = jnp.maximum(h @ W + b, 0.0)
        h = jnp.maximum((h - mean) / jnp.sqrt(var + eps) * gamma + beta, 0.0)
    Wp, bp, Wf, bf = raw_params[idx:idx + 4]
    power = jax.nn.sigmoid(h @ Wp + bp) * (max_power - min_power) + min_power
    fl = (h @ Wf + bf).reshape(x.shape[0], num_pairs, num_freq)
    fa = jax.nn.softmax(fl, axis=2)
    return power, fa


if __name__ == "__main__":
    # Small configuration consistent with the module.
    num_pairs = 4
    num_freq = 4
    hidden_sizes = [32, 32]
    batch = 8

    key = jax.random.PRNGKey(0)
    kx, kp = jax.random.split(key)
    x = jax.random.normal(kx, (batch, num_pairs * num_pairs), dtype=jnp.float32)
    raw_params = init_params(kp, num_pairs, num_freq, hidden_sizes)
    packed_params = fold_params(raw_params, num_pairs, num_freq, len(hidden_sizes))

    power_values, fa_probs = d2d_forward(
        x, packed_params, num_pairs=num_pairs, num_freq=num_freq,
        num_hidden=len(hidden_sizes))
    jax.block_until_ready((power_values, fa_probs))

    # Verify against pure-JAX f32 reference (kernel matmuls use bf16 operands, so the
    # tolerance reflects ~1e-2-level bf16 differences; the softmax itself is f32-exact).
    ref_power, ref_fa = d2d_reference(
        x, raw_params, num_pairs, num_freq, len(hidden_sizes))
    assert power_values.shape == (batch, num_pairs)
    assert fa_probs.shape == (batch, num_pairs, num_freq)
    assert jnp.allclose(power_values, ref_power, rtol=2e-2, atol=2e-2)
    assert jnp.allclose(fa_probs, ref_fa, rtol=2e-2, atol=2e-2)
    # Softmax normalization is computed in f32 with an exact reciprocal -> tight sum check.
    assert jnp.allclose(jnp.sum(fa_probs, axis=-1), 1.0, atol=1e-5)
    assert bool(jnp.all(power_values >= 0.0)) and bool(jnp.all(power_values <= 1.0 + 1e-6))

    print("KERNEL_OK")
</pallas_src>

<mosaic_0001>
module attributes {stable_mosaic.version = 11 : i64} {
  func.func @kernel(%arg0: i32, %arg1: memref<8x16xf32, #tpu.memory_space<vmem>>, %arg2: memref<16x32xbf16, #tpu.memory_space<vmem>>, %arg3: memref<3x32xf32, #tpu.memory_space<vmem>>, %arg4: memref<32x32xbf16, #tpu.memory_space<vmem>>, %arg5: memref<3x32xf32, #tpu.memory_space<vmem>>, %arg6: memref<32x20xbf16, #tpu.memory_space<vmem>>, %arg7: memref<1x20xf32, #tpu.memory_space<vmem>>, %arg8: memref<20x20xf32, #tpu.memory_space<vmem>>, %arg9: memref<8x20xf32, #tpu.memory_space<vmem>>) attributes {dimension_semantics = [#tpu.dimension_semantics<parallel>], iteration_bounds = array<i64: 1>, scalar_prefetch = 0 : i64, scratch_operands = 0 : i64, tpu.core_type = #tpu.core_type<tc>, window_params = [{transform_indices = @transform_0, window_bounds = array<i64: 8, 16>}, {pipeline_mode = #tpu.pipeline_mode<synchronous>, transform_indices = @transform_1, window_bounds = array<i64: 16, 32>}, {pipeline_mode = #tpu.pipeline_mode<synchronous>, transform_indices = @transform_2, window_bounds = array<i64: 3, 32>}, {pipeline_mode = #tpu.pipeline_mode<synchronous>, transform_indices = @transform_3, window_bounds = array<i64: 32, 32>}, {pipeline_mode = #tpu.pipeline_mode<synchronous>, transform_indices = @transform_4, window_bounds = array<i64: 3, 32>}, {pipeline_mode = #tpu.pipeline_mode<synchronous>, transform_indices = @transform_5, window_bounds = array<i64: 32, 20>}, {pipeline_mode = #tpu.pipeline_mode<synchronous>, transform_indices = @transform_6, window_bounds = array<i64: 1, 20>}, {pipeline_mode = #tpu.pipeline_mode<synchronous>, transform_indices = @transform_7, window_bounds = array<i64: 20, 20>}, {transform_indices = @transform_8, window_bounds = array<i64: 8, 20>}]} {
    %c0 = arith.constant 0 : index
    %c0_0 = arith.constant 0 : index
    %0 = vector.load %arg1[%c0, %c0_0] : memref<8x16xf32, #tpu.memory_space<vmem>>, vector<8x16xf32>
    %c0_1 = arith.constant 0 : index
    %c0_2 = arith.constant 0 : index
    %1 = vector.load %arg2[%c0_1, %c0_2] : memref<16x32xbf16, #tpu.memory_space<vmem>>, vector<16x32xbf16>
    %c0_3 = arith.constant 0 : index
    %c0_4 = arith.constant 0 : index
    %2 = vector.load %arg3[%c0_3, %c0_4] : memref<3x32xf32, #tpu.memory_space<vmem>>, vector<3x32xf32>
    %3 = vector.extract_strided_slice %2 {offsets = [0, 0], sizes = [1, 32], strides = [1, 1]} : vector<3x32xf32> to vector<1x32xf32>
    %4 = vector.extract_strided_slice %2 {offsets = [1, 0], sizes = [1, 32], strides = [1, 1]} : vector<3x32xf32> to vector<1x32xf32>
    %5 = vector.extract_strided_slice %2 {offsets = [2, 0], sizes = [1, 32], strides = [1, 1]} : vector<3x32xf32> to vector<1x32xf32>
    %6 = arith.truncf %0 : vector<8x16xf32> to vector<8x16xbf16>
    %cst = arith.constant dense<0.000000e+00> : vector<8x32xf32>
    %7 = tpu.matmul %6, %1, %cst {dimension_numbers = #tpu.dot_dimension_numbers<[1], [0], [0], [1], [0, 0, 1, 1], [], []>} : vector<8x16xbf16>, vector<16x32xbf16>, vector<8x32xf32> -> vector<8x32xf32>
    %8 = vector.broadcast %3 : vector<1x32xf32> to vector<8x32xf32>
    %9 = arith.addf %7, %8 : vector<8x32xf32>
    %cst_5 = arith.constant 0.000000e+00 : f32
    %10 = vector.broadcast %cst_5 : f32 to vector<8x32xf32>
    %11 = arith.maximumf %9, %10 : vector<8x32xf32>
    %12 = vector.broadcast %4 : vector<1x32xf32> to vector<8x32xf32>
    %13 = arith.mulf %11, %12 : vector<8x32xf32>
    %14 = vector.broadcast %5 : vector<1x32xf32> to vector<8x32xf32>
    %15 = arith.addf %13, %14 : vector<8x32xf32>
    %cst_6 = arith.constant 0.000000e+00 : f32
    %16 = vector.broadcast %cst_6 : f32 to vector<8x32xf32>
    %17 = arith.maximumf %15, %16 : vector<8x32xf32>
    %c0_7 = arith.constant 0 : index
    %c0_8 = arith.constant 0 : index
    %18 = vector.load %arg4[%c0_7, %c0_8] : memref<32x32xbf16, #tpu.memory_space<vmem>>, vector<32x32xbf16>
    %c0_9 = arith.constant 0 : index
    %c0_10 = arith.constant 0 : index
    %19 = vector.load %arg5[%c0_9, %c0_10] : memref<3x32xf32, #tpu.memory_space<vmem>>, vector<3x32xf32>
    %20 = vector.extract_strided_slice %19 {offsets = [0, 0], sizes = [1, 32], strides = [1, 1]} : vector<3x32xf32> to vector<1x32xf32>
    %21 = vector.extract_strided_slice %19 {offsets = [1, 0], sizes = [1, 32], strides = [1, 1]} : vector<3x32xf32> to vector<1x32xf32>
    %22 = vector.extract_strided_slice %19 {offsets = [2, 0], sizes = [1, 32], strides = [1, 1]} : vector<3x32xf32> to vector<1x32xf32>
    %23 = arith.truncf %17 : vector<8x32xf32> to vector<8x32xbf16>
    %cst_11 = arith.constant dense<0.000000e+00> : vector<8x32xf32>
    %24 = tpu.matmul %23, %18, %cst_11 {dimension_numbers = #tpu.dot_dimension_numbers<[1], [0], [0], [1], [0, 0, 1, 1], [], []>} : vector<8x32xbf16>, vector<32x32xbf16>, vector<8x32xf32> -> vector<8x32xf32>
    %25 = vector.broadcast %20 : vector<1x32xf32> to vector<8x32xf32>
    %26 = arith.addf %24, %25 : vector<8x32xf32>
    %cst_12 = arith.constant 0.000000e+00 : f32
    %27 = vector.broadcast %cst_12 : f32 to vector<8x32xf32>
    %28 = arith.maximumf %26, %27 : vector<8x32xf32>
    %29 = vector.broadcast %21 : vector<1x32xf32> to vector<8x32xf32>
    %30 = arith.mulf %28, %29 : vector<8x32xf32>
    %31 = vector.broadcast %22 : vector<1x32xf32> to vector<8x32xf32>
    %32 = arith.addf %30, %31 : vector<8x32xf32>
    %cst_13 = arith.constant 0.000000e+00 : f32
    %33 = vector.broadcast %cst_13 : f32 to vector<8x32xf32>
    %34 = arith.maximumf %32, %33 : vector<8x32xf32>
    %c0_14 = arith.constant 0 : index
    %c0_15 = arith.constant 0 : index
    %35 = vector.load %arg6[%c0_14, %c0_15] : memref<32x20xbf16, #tpu.memory_space<vmem>>, vector<32x20xbf16>
    %c0_16 = arith.constant 0 : index
    %c0_17 = arith.constant 0 : index
    %36 = vector.load %arg7[%c0_16, %c0_17] : memref<1x20xf32, #tpu.memory_space<vmem>>, vector<1x20xf32>
    %c0_18 = arith.constant 0 : index
    %c0_19 = arith.constant 0 : index
    %37 = vector.load %arg8[%c0_18, %c0_19] : memref<20x20xf32, #tpu.memory_space<vmem>>, vector<20x20xf32>
    %38 = arith.truncf %34 : vector<8x32xf32> to vector<8x32xbf16>
    %cst_20 = arith.constant dense<0.000000e+00> : vector<8x20xf32>
    %39 = tpu.matmul %38, %35, %cst_20 {dimension_numbers = #tpu.dot_dimension_numbers<[1], [0], [0], [1], [0, 0, 1, 1], [], []>} : vector<8x32xbf16>, vector<32x20xbf16>, vector<8x20xf32> -> vector<8x20xf32>
    %40 = vector.broadcast %36 : vector<1x20xf32> to vector<8x20xf32>
    %41 = arith.addf %39, %40 : vector<8x20xf32>
    %42 = tpu.iota {dimensions = array<i32: 1>} : vector<8x20xi32>
    %c16_i32 = arith.constant 16 : i32
    %43 = vector.broadcast %c16_i32 : i32 to vector<8x20xi32>
    %44 = arith.cmpi slt, %42, %43 : vector<8x20xi32>
    %cst_21 = arith.constant 0xFF800000 : f32
    %45 = vector.broadcast %cst_21 : f32 to vector<8x20xf32>
    %46 = arith.select %44, %41, %45 : vector<8x20xi1>, vector<8x20xf32>
    %cst_22 = arith.constant dense<0xFF800000> : vector<8xf32>
    %47 = vector.multi_reduction <maximumf>, %46, %cst_22 [1] : vector<8x20xf32> to vector<8xf32>
    %48 = vector.shape_cast %47 : vector<8xf32> to vector<8x1xf32>
    %49 = vector.broadcast %48 : vector<8x1xf32> to vector<8x20xf32>
    %50 = arith.subf %46, %49 : vector<8x20xf32>
    %51 = math.exp %50 : vector<8x20xf32>
    %cst_23 = arith.constant dense<0.000000e+00> : vector<8x20xf32>
    %52 = tpu.matmul %51, %37, %cst_23 {dimension_numbers = #tpu.dot_dimension_numbers<[1], [0], [0], [1], [0, 0, 1, 1], [], []>} : vector<8x20xf32>, vector<20x20xf32>, vector<8x20xf32> -> vector<8x20xf32>
    %cst_24 = arith.constant 1.000000e+00 : f32
    %53 = vector.broadcast %cst_24 : f32 to vector<8x20xf32>
    %54 = arith.select %44, %52, %53 : vector<8x20xi1>, vector<8x20xf32>
    %55 = tpu.reciprocal %54 : vector<8x20xf32> -> vector<8x20xf32>
    %56 = arith.mulf %51, %55 : vector<8x20xf32>
    %57 = arith.negf %41 : vector<8x20xf32>
    %58 = math.exp %57 : vector<8x20xf32>
    %cst_25 = arith.constant 1.000000e+00 : f32
    %59 = vector.broadcast %cst_25 : f32 to vector<8x20xf32>
    %60 = arith.addf %59, %58 : vector<8x20xf32>
    %61 = arith.divf %59, %60 : vector<8x20xf32>
    %cst_26 = arith.constant 1.000000e+00 : f32
    %62 = vector.broadcast %cst_26 : f32 to vector<8x20xf32>
    %63 = arith.mulf %61, %62 : vector<8x20xf32>
    %cst_27 = arith.constant 1.000000e-10 : f32
    %64 = vector.broadcast %cst_27 : f32 to vector<8x20xf32>
    %65 = arith.addf %63, %64 : vector<8x20xf32>
    %66 = arith.select %44, %56, %65 : vector<8x20xi1>, vector<8x20xf32>
    %c0_28 = arith.constant 0 : index
    %c0_29 = arith.constant 0 : index
    %67 = vector.load %arg9[%c0_28, %c0_29] : memref<8x20xf32, #tpu.memory_space<vmem>>, vector<8x20xf32>
    tpu.vector_store %arg9[%c0_28, %c0_29], %66 {strides = array<i32>} : memref<8x20xf32, #tpu.memory_space<vmem>>, vector<8x20xf32>,
    return
  }
  func.func @transform_0(%arg0: i32) -> (i32, i32) {
    %c0_i32 = arith.constant 0 : i32
    %c0_i32_0 = arith.constant 0 : i32
    return %arg0, %c0_i32 : i32, i32
  }
  func.func @transform_1(%arg0: i32) -> (i32, i32) {
    %c0_i32 = arith.constant 0 : i32
    %c0_i32_0 = arith.constant 0 : i32
    %c0_i32_1 = arith.constant 0 : i32
    return %c0_i32, %c0_i32_0 : i32, i32
  }
  func.func @transform_2(%arg0: i32) -> (i32, i32) {
    %c0_i32 = arith.constant 0 : i32
    %c0_i32_0 = arith.constant 0 : i32
    %c0_i32_1 = arith.constant 0 : i32
    return %c0_i32, %c0_i32_0 : i32, i32
  }
  func.func @transform_3(%arg0: i32) -> (i32, i32) {
    %c0_i32 = arith.constant 0 : i32
    %c0_i32_0 = arith.constant 0 : i32
    %c0_i32_1 = arith.constant 0 : i32
    return %c0_i32, %c0_i32_0 : i32, i32
  }
  func.func @transform_4(%arg0: i32) -> (i32, i32) {
    %c0_i32 = arith.constant 0 : i32
    %c0_i32_0 = arith.constant 0 : i32
    %c0_i32_1 = arith.constant 0 : i32
    return %c0_i32, %c0_i32_0 : i32, i32
  }
  func.func @transform_5(%arg0: i32) -> (i32, i32) {
    %c0_i32 = arith.constant 0 : i32
    %c0_i32_0 = arith.constant 0 : i32
    %c0_i32_1 = arith.constant 0 : i32
    return %c0_i32, %c0_i32_0 : i32, i32
  }
  func.func @transform_6(%arg0: i32) -> (i32, i32) {
    %c0_i32 = arith.constant 0 : i32
    %c0_i32_0 = arith.constant 0 : i32
    %c0_i32_1 = arith.constant 0 : i32
    return %c0_i32, %c0_i32_0 : i32, i32
  }
  func.func @transform_7(%arg0: i32) -> (i32, i32) {
    %c0_i32 = arith.constant 0 : i32
    %c0_i32_0 = arith.constant 0 : i32
    %c0_i32_1 = arith.constant 0 : i32
    return %c0_i32, %c0_i32_0 : i32, i32
  }
  func.func @transform_8(%arg0: i32) -> (i32, i32) {
    %c0_i32 = arith.constant 0 : i32
    %c0_i32_0 = arith.constant 0 : i32
    return %arg0, %c0_i32 : i32, i32
  }
}

</mosaic_0001>

<llo_original>
// kernel: d2d_forward.1
$region0: #{d2d_forward.1}
  #allocation0 [shape = 'u32[]', space=smem, size = 0x4, offset = 0x4, fixed_abs, tag = 'smem constant byte address 0x4 - core index']
  #allocation1 [shape = 'u32[72,128]{1,0:T(1,128)}', space=vmem, size = 0x9000, scoped, tag = 'internal scratch']
  %s0 = inlined_call_operand.vmem [shape: f32[8,16], index: 0, kind: input, shape index: {}]
  %s1 = inlined_call_operand.hbm [shape: bf16[16,32], index: 1, kind: input, shape index: {}]
  %s2 = inlined_call_operand.hbm [shape: f32[3,32], index: 2, kind: input, shape index: {}]
  %s3 = inlined_call_operand.hbm [shape: bf16[32,32], index: 3, kind: input, shape index: {}]
  %s4 = inlined_call_operand.hbm [shape: f32[3,32], index: 4, kind: input, shape index: {}]
  %s5 = inlined_call_operand.vmem [shape: bf16[32,20], index: 5, kind: input, shape index: {}]
  %s6 = inlined_call_operand.vmem [shape: f32[1,20], index: 6, kind: input, shape index: {}]
  %s7 = inlined_call_operand.vmem [shape: f32[20,20], index: 7, kind: input, shape index: {}]
  %s8 = inlined_call_operand.vmem [shape: f32[8,20], index: 8, kind: output, shape index: {}]
  %s9 = sld [smem:[#allocation0]]
  $region58: #{d2d_forward.1} parent=0
    _
  %s11 = ssub.s32 1, %s9
  %s12 = scalar_select 0, %s11, %s9
  $region1: #{d2d_forward.1} parent=0
    #allocation2 [shape = 'u8[4096]{0}', space=vmem, size = 0x1000, scoped, tag = 'input window, operand 1, single buffered']
    #allocation3 [shape = 's32[1]{0}', space=sflag, size = 0x4, scoped, tag = 'scoped memory for d2d_forward.1']
    #allocation4 [shape = 'u8[2048]{0}', space=vmem, size = 0x800, scoped, tag = 'input window, operand 2, single buffered']
    #allocation5 [shape = 's32[1]{0}', space=sflag, size = 0x4, scoped, tag = 'scoped memory for d2d_forward.1']
    #allocation6 [shape = 'u8[8192]{0}', space=vmem, size = 0x2000, scoped, tag = 'input window, operand 3, single buffered']
    #allocation7 [shape = 'u8[2048]{0}', space=vmem, size = 0x800, scoped, tag = 'input window, operand 4, single buffered']
    #allocation8 [shape = 's32[1]{0}', space=sflag, size = 0x4, scoped, tag = 'scoped memory for d2d_forward.1']
    %13 = vsyncpa [#allocation3], 0
    %14 = vsyncpa [#allocation5], 0
    %15 = vsyncpa [#allocation8], 0
    // Predicated region
    $region2: #{d2d_forward.1} parent=1 // pred_check
      _
    $region3: #{d2d_forward.1} parent=1 // pred_check_branch
      %17 = sbr.rel (0) target = $region5
    $region4: #{d2d_forward.1} parent=1 // pred_region
      _
    $region5: #{d2d_forward.1} parent=1 // pred_fallthru
      _
    // Predicated region
    $region6: #{d2d_forward.1} parent=1 // pred_check
      _
    $region7: #{d2d_forward.1} parent=1 // pred_check_branch
      %19 = sbr.rel (0) target = $region9
    $region8: #{d2d_forward.1} parent=1 // pred_region
      %21 = vsyncadd [#allocation3], 0
      %s22 = sshll.u32 %s1, 4
      %s23 = int_to_ptr.hbm [resolvable:$true] %s22
      %s24 = sshll.u32 [#allocation2], 4
      %s25 = int_to_ptr.vmem [resolvable:$true] %s24
      %30 = dma.hbm_to_vmem [thread:$0]  %s23, 128, %s25, [#allocation3], 64, 64, 4
    $region9: #{d2d_forward.1} parent=1 // pred_fallthru
      _
    // Predicated region
    $region10: #{d2d_forward.1} parent=1 // pred_check
      _
    $region11: #{d2d_forward.1} parent=1 // pred_check_branch
      %32 = sbr.rel (0) target = $region13
    $region12: #{d2d_forward.1} parent=1 // pred_region
      %34 = vsyncadd [#allocation5], 0
      %s36 = sshll.u32 %s2, 4
      %s37 = int_to_ptr.hbm [resolvable:$true] %s36
      %s38 = sshll.u32 [#allocation4], 4
      %s39 = int_to_ptr.vmem [resolvable:$true] %s38
      %41 = dma.hbm_to_vmem [thread:$0]  %s37, 64, %s39, [#allocation5]
    $region13: #{d2d_forward.1} parent=1 // pred_fallthru
      _
    // Predicated region
    $region14: #{d2d_forward.1} parent=1 // pred_check
      _
    $region15: #{d2d_forward.1} parent=1 // pred_check_branch
      %43 = sbr.rel (0) target = $region17
    $region16: #{d2d_forward.1} parent=1 // pred_region
      %45 = vsyncadd [#allocation5], 0
      %s46 = sshll.u32 %s3, 4
      %s47 = int_to_ptr.hbm [resolvable:$true] %s46
      %s48 = sshll.u32 [#allocation6], 4
      %s49 = int_to_ptr.vmem [resolvable:$true] %s48
      %54 = dma.hbm_to_vmem [thread:$0]  %s47, 256, %s49, [#allocation5], 64, 64, 4
    $region17: #{d2d_forward.1} parent=1 // pred_fallthru
      _
    // Predicated region
    $region18: #{d2d_forward.1} parent=1 // pred_check
      _
    $region19: #{d2d_forward.1} parent=1 // pred_check_branch
      %56 = sbr.rel (0) target = $region21
    $region20: #{d2d_forward.1} parent=1 // pred_region
      %58 = vsyncadd [#allocation8], 0
      %s60 = sshll.u32 %s4, 4
      %s61 = int_to_ptr.hbm [resolvable:$true] %s60
      %s62 = sshll.u32 [#allocation7], 4
      %s63 = int_to_ptr.vmem [resolvable:$true] %s62
      %65 = dma.hbm_to_vmem [thread:$0]  %s61, 64, %s63, [#allocation8]
    $region21: #{d2d_forward.1} parent=1 // pred_fallthru
      _
    // Predicated region
    $region22: #{d2d_forward.1} parent=1 // pred_check
      _
    $region23: #{d2d_forward.1} parent=1 // pred_check_branch
      %67 = sbr.rel (0) target = $region25
    $region24: #{d2d_forward.1} parent=1 // pred_region
      _
    $region25: #{d2d_forward.1} parent=1 // pred_fallthru
      _
    // Predicated region
    $region26: #{d2d_forward.1} parent=1 // pred_check
      _
    $region27: #{d2d_forward.1} parent=1 // pred_check_branch
      %69 = sbr.rel (0) target = $region29
    $region28: #{d2d_forward.1} parent=1 // pred_region
      _
    $region29: #{d2d_forward.1} parent=1 // pred_fallthru
      _
    // Predicated region
    $region30: #{d2d_forward.1} parent=1 // pred_check
      _
    $region31: #{d2d_forward.1} parent=1 // pred_check_branch
      %71 = sbr.rel (0) target = $region33
    $region32: #{d2d_forward.1} parent=1 // pred_region
      _
    $region33: #{d2d_forward.1} parent=1 // pred_fallthru
      _
    // Predicated region
    $region34: #{d2d_forward.1} parent=1 // pred_check
      _
    $region35: #{d2d_forward.1} parent=1 // pred_check_branch
      %73 = sbr.rel (0) target = $region37
    $region36: #{d2d_forward.1} parent=1 // pred_region
      %75 = dma.done [#allocation3], 128
    $region37: #{d2d_forward.1} parent=1 // pred_fallthru
      _
    // Predicated region
    $region38: #{d2d_forward.1} parent=1 // pred_check
      _
    $region39: #{d2d_forward.1} parent=1 // pred_check_branch
      %77 = sbr.rel (0) target = $region41
    $region40: #{d2d_forward.1} parent=1 // pred_region
      %79 = dma.done [#allocation5], 64
    $region41: #{d2d_forward.1} parent=1 // pred_fallthru
      _
    // Predicated region
    $region42: #{d2d_forward.1} parent=1 // pred_check
      _
    $region43: #{d2d_forward.1} parent=1 // pred_check_branch
      %81 = sbr.rel (0) target = $region45
    $region44: #{d2d_forward.1} parent=1 // pred_region
      %83 = dma.done [#allocation5], 256
    $region45: #{d2d_forward.1} parent=1 // pred_fallthru
      _
    // Predicated region
    $region46: #{d2d_forward.1} parent=1 // pred_check
      _
    $region47: #{d2d_forward.1} parent=1 // pred_check_branch
      %85 = sbr.rel (0) target = $region49
    $region48: #{d2d_forward.1} parent=1 // pred_region
      %87 = dma.done [#allocation8], 64
    $region49: #{d2d_forward.1} parent=1 // pred_fallthru
      _
    %v89 = vld [vmem:[%s0] sm:$0xff]
    %v90 = vld [vmem:[#allocation2] sm:$0xf]
    %v91 = vld [vmem:[#allocation2 + $0x4] sm:$0xf]
    %v92 = vld [vmem:[#allocation4] sm:$0x7]
    %v93 = vpack.c.bf16 %v89, %v89
    %v94 = vperm.slane %v92, 0
    %v97 = vunpack.c.l.b16 %v90
    %v98 = vunpack.c.l.b16 %v91
    %v99 = vpack.c.b16 %v98, %v97
    %vm101 = vcmask 130048
    %v103 = vsel %vm101, %v93, 0
    %105 = vmatpush.bf16.msra.mxu0 0
    %106 = vmatpush.bf16.msra.mxu0 0
    %107 = vmatpush.bf16.msra.mxu0 0
    %108 = vmatpush.bf16.msra.mxu0 0
    %109 = vmatpush.bf16.msra.mxu0 0
    %110 = vmatpush.bf16.msra.mxu0 0
    %111 = vmatpush.bf16.msra.mxu0 0
    %112 = vmatpush.bf16.msra.mxu0 %v99
    %113 = vmatmul.bf16.gmra.mxu0 %v103
    %v114 = vpop.f32.mrf.mxu0
    %v115 = vadd.f32 %v94, %v114
    %v116 = vpop.f32.mrf.mxu0
    %117 = vdwg.mxu0
    %v118 = vmax.f32 %v115, 0.0
    %v119 = vperm.slane %v92, 1
    %v120 = vmul.f32 %v118, %v119
    %v121 = vperm.slane %v92, 2
    %v122 = vadd.f32 %v120, %v121
    %v123 = vmax.f32 %v122, 0.0
    %v124 = vld [vmem:[#allocation6] sm:$0xf]
    %v125 = vld [vmem:[#allocation6 + $0x4] sm:$0xf]
    %v126 = vld [vmem:[#allocation6 + $0x8] sm:$0xf]
    %v127 = vld [vmem:[#allocation6 + $0xc] sm:$0xf]
    %v128 = vld [vmem:[#allocation7] sm:$0x7]
    %v129 = vpack.c.bf16 %v123, %v123
    %v130 = vperm.slane %v128, 0
    %v135 = vunpack.c.l.b16 %v124
    %v136 = vunpack.c.l.b16 %v125
    %v137 = vunpack.c.l.b16 %v126
    %v138 = vunpack.c.l.b16 %v127
    %v139 = vpack.c.b16 %v136, %v135
    %v140 = vpack.c.b16 %v138, %v137
    %vm143 = vcmask 261120
    %v145 = vsel %vm143, %v129, 0
    %147 = vmatpush.bf16.msra.mxu0 0
    %148 = vmatpush.bf16.msra.mxu0 0
    %149 = vmatpush.bf16.msra.mxu0 0
    %150 = vmatpush.bf16.msra.mxu0 0
    %151 = vmatpush.bf16.msra.mxu0 0
    %152 = vmatpush.bf16.msra.mxu0 0
    %153 = vmatpush.bf16.msra.mxu0 %v140
    %154 = vmatpush.bf16.msra.mxu0 %v139
    %155 = vmatmul.bf16.gmra.mxu0 %v145
    %v156 = vpop.f32.mrf.mxu0
    %v157 = vadd.f32 %v130, %v156
    %v158 = vpop.f32.mrf.mxu0
    %159 = vdwg.mxu0
    %v160 = vmax.f32 %v157, 0.0
    %v161 = vperm.slane %v128, 1
    %v162 = vmul.f32 %v160, %v161
    %v163 = vperm.slane %v128, 2
    %v164 = vadd.f32 %v162, %v163
    %v165 = vmax.f32 %v164, 0.0
    %v166 = vld [vmem:[%s5] sm:$0xf]
    %v167 = vld [vmem:[%s5 + $0x4] sm:$0xf]
    %v168 = vld [vmem:[%s5 + $0x8] sm:$0xf]
    %v169 = vld [vmem:[%s5 + $0xc] sm:$0xf]
    %v170 = vld [vmem:[%s6] sm:$0x1]
    %v171 = vld [vmem:[%s7] sm:$0xff]
    %v172 = vld [vmem:[%s7 + $0x8] sm:$0xff]
    %v173 = vld [vmem:[%s7 + $0x10] sm:$0xf]
    %v174 = vpack.c.bf16 %v165, %v165
    %v176 = vperm.slane %v170, 0
    %v182 = vunpack.c.l.b16 %v166
    %v183 = vunpack.c.l.b16 %v167
    %v184 = vunpack.c.l.b16 %v168
    %v185 = vunpack.c.l.b16 %v169
    %v186 = vpack.c.b16 %v183, %v182
    %v187 = vpack.c.b16 %v185, %v184
    %v191 = vsel %vm143, %v174, 0
    %193 = vmatpush.bf16.msra.mxu0 0
    %194 = vmatpush.bf16.msra.mxu0 0
    %195 = vmatpush.bf16.msra.mxu0 0
    %196 = vmatpush.bf16.msra.mxu0 0
    %197 = vmatpush.bf16.msra.mxu0 0
    %198 = vmatpush.bf16.msra.mxu0 0
    %199 = vmatpush.bf16.msra.mxu0 %v187
    %200 = vmatpush.bf16.msra.mxu0 %v186
    %201 = vmatmul.bf16.gmra.mxu0 %v191
    %v202 = vpop.f32.mrf.mxu0
    %v203 = vadd.f32 %v176, %v202
    %v204 = vpop.f32.mrf.mxu0
    %205 = vdwg.mxu0
    %v206 = vlaneseq
    %v207 = vand.u32 %v206, 127
    %vm208 = vcmp.lt.s32.totalorder %v207, 16
    %v209 = vsel %vm208, %v203, -inf
    %vm210 = vcmask 162816
    %v211 = vsel %vm210, %v209, -inf
    %212 = vmax.xlane.f32.xlu0 %v211
    %v213 = vpop.xlane.xlu0 %212
    %v214 = vsub.f32 %v209, %v213
    %v215 = vmul.f32 %v214, 1.442695
    %v216 = vpow.pop %v215
    %v218 = vsel %vm210, %v216, 0
    %vm220 = vcmask 1043456
    %v222 = vsel %vm220, %v173, 0
    %224 = vmatpush.msra.mxu0 0.0
    %225 = vmatpush.msra.mxu0 0.0
    %226 = vmatpush.msra.mxu0 0.0
    %227 = vmatpush.msra.mxu0 0.0
    %228 = vmatpush.msra.mxu0 0.0
    %229 = vmatpush.msra.mxu0 0.0
    %230 = vmatpush.msra.mxu0 0.0
    %231 = vmatpush.msra.mxu0 0.0
    %232 = vmatpush.msra.mxu0 0.0
    %233 = vmatpush.msra.mxu0 0.0
    %234 = vmatpush.msra.mxu0 0.0
    %235 = vmatpush.msra.mxu0 0.0
    %236 = vmatpush.msra.mxu0 0.0
    %237 = vmatpush.msra.mxu0 %v222
    %238 = vmatpush.msra.mxu0 %v172
    %239 = vmatpush.msra.mxu0 %v171
    %240 = vmatmul.f32.gmra.mxu0 %v218
    %v241 = vpop.f32.mrf.mxu0
    %v242 = vadd.f32 0.0, %v241
    %243 = vdwg.mxu0
    %v244 = vsel %vm208, %v242, 1.0
    %v245 = vrcp.pop %v244
    %v246 = vmul.f32 %v244, %v245
    %v247 = vsub.f32 1.0, %v246
    %v248 = vmul.f32 %v245, %v247
    %v249 = vadd.f32 %v245, %v248
    %vm250 = vweird.f32 %v244
    %vm251 = vweird.f32 %v245
    %vm252 = vmor %vm250, %vm251
    %v253 = vsel %vm252, %v245, %v249
    %v254 = vand.u32 2147483647, %v244
    %vm255 = vcmp.eq.f32.partialorder %v254, 8.507059e+37
    %v256 = vand.u32 %v244, 2147483648
    %v257 = vor.u32 1.1754944e-38, %v256
    %v258 = vsel %vm255, %v257, %v253
    %v259 = vmul.f32 %v216, %v258
    %v260 = vxor.u32 %v203, 2147483648
    %v261 = vmul.f32 %v260, 1.442695
    %v262 = vpow.pop %v261
    %v263 = vadd.f32 %v262, 1.0
    %v264 = vrcp.pop %v263
    %v265 = vmul.f32 %v263, %v264
    %v266 = vsub.f32 1.0, %v265
    %v267 = vmul.f32 %v264, %v266
    %v268 = vadd.f32 %v264, %v267
    %vm269 = vweird.f32 %v263
    %vm270 = vweird.f32 %v264
    %vm271 = vmor %vm269, %vm270
    %v272 = vsel %vm271, %v264, %v268
    %v273 = vand.u32 2147483647, %v263
    %vm274 = vcmp.eq.f32.partialorder %v273, 8.507059e+37
    %v275 = vand.u32 %v263, 2147483648
    %v276 = vor.u32 1.1754944e-38, %v275
    %v277 = vsel %vm274, %v276, %v272
    %v278 = vmul.f32 1.0, %v277
    %v279 = vadd.f32 %v278, 1e-10
    %v280 = vsel %vm208, %v259, %v279
    %281 = vst.msk [vmem:[%s8] sm:$0xff] %vm210, %v280
    // Predicated region
    $region50: #{d2d_forward.1} parent=1 // pred_check
      _
    $region51: #{d2d_forward.1} parent=1 // pred_check_branch
      %283 = sbr.rel (0) target = $region53
    $region52: #{d2d_forward.1} parent=1 // pred_region
      _
    $region53: #{d2d_forward.1} parent=1 // pred_fallthru
      _
    // Predicated region
    $region54: #{d2d_forward.1} parent=1 // pred_check
      _
    $region55: #{d2d_forward.1} parent=1 // pred_check_branch
      %285 = sbr.rel (0) target = $region57
    $region56: #{d2d_forward.1} parent=1 // pred_region
      _
    $region57: #{d2d_forward.1} parent=1 // pred_fallthru
      _
    %286 = vsyncpa [#allocation3], 1
    %287 = vsyncpa [#allocation5], 1
    %288 = vsyncpa [#allocation8], 1

</llo_original>
